<compile_context>
chip_gen: v7x
topology: tpu7x:2x2x1
jax: 0.10.0
libtpu: 0.0.40
codegen_flags: <defaults>
</compile_context>

<pallas_src>
import functools

import jax
import jax.numpy as jnp
from jax.experimental import pallas as pl
from jax.experimental.pallas import tpu as pltpu

BINS = 10
IGNORE_INDEX = -100
LANES = 128
BINS_PAD = 16               # bins padded to two sublane-tiles; rows 0..9 are real bins
VALID_ROW = BINS_PAD - 1    # sublane row 15 accumulates the valid-row count


def ghmc_kernel(pred_ref, tgt_ref, counts_ref, sums_ref, *, n_rows_total):
    p = pl.program_id(0)              # core-parallel split of the row range
    s = pl.program_id(1)              # sequential streaming within the split
    tiles_per_split = pl.num_programs(1)

    @pl.when(s == 0)
    def _():
        counts_ref[...] = jnp.zeros_like(counts_ref)
        sums_ref[...] = jnp.zeros_like(sums_ref)

    pred = pred_ref[...].astype(jnp.float32)   # (C, T): classes on sublanes, rows on lanes
    tgt = tgt_ref[...]                         # (1, T) int32
    C, T = pred.shape

    # Columns beyond the true N (padding of the last tile) are masked out of everything.
    base = (p * tiles_per_split + s) * T
    col = jax.lax.broadcasted_iota(jnp.int32, (1, T), 1) + base
    in_bounds = col < n_rows_total                         # (1, T)
    valid = in_bounds & (tgt != IGNORE_INDEX)              # (1, T)

    # log-sum-exp gather over the class (sublane) axis: logp_true = pred[t] - logsumexp(pred).
    class_ids = jax.lax.broadcasted_iota(jnp.int32, (C, T), 0)
    onehot = (class_ids == tgt).astype(jnp.float32)                   # (C, T)
    logit_true = jnp.sum(pred * onehot, axis=0, keepdims=True)        # (1, T)
    m = jnp.max(pred, axis=0, keepdims=True)
    lse = m + jnp.log(jnp.sum(jnp.exp(pred - m), axis=0, keepdims=True))
    logp_true = logit_true - lse                                      # (1, T), finite
    g = jnp.abs(jnp.exp(logp_true) - 1.0)                             # (1, T) in [0, 1]

    # Single-compare binning: floor(g*10) in 0..9; g == 1.0 -> 10 -> padding row (dropped),
    # matching the reference's exclusive last edge. Row VALID_ROW carries the valid mask.
    bin_idx = jnp.floor(g * BINS).astype(jnp.int32)                   # (1, T)
    sub = jax.lax.broadcasted_iota(jnp.int32, (BINS_PAD, T), 0)
    member = ((sub == bin_idx) | ((sub == VALID_ROW) & valid)) & in_bounds
    member_f = member.astype(jnp.float32)                             # (16, T)

    # NaN-safe: ignored / out-of-bounds rows contribute exactly 0 to the bin sums.
    vlogp = jnp.where(valid, logp_true, 0.0)                          # (1, T)
    mlogp = member_f * vlogp                                          # (16, T)

    # Lane-partial accumulation: pure VALU slice-adds (128-aligned static slices are vreg
    # selects); the cross-lane XLU reduction is deferred to the epilogue, paid once per call.
    cnt = jnp.zeros((BINS_PAD, LANES), jnp.float32)
    sm = jnp.zeros((BINS_PAD, LANES), jnp.float32)
    for ci in range(T // LANES):
        cnt = cnt + member_f[:, ci * LANES:(ci + 1) * LANES]
        sm = sm + mlogp[:, ci * LANES:(ci + 1) * LANES]
    counts_ref[...] += cnt
    sums_ref[...] += sm


def _round_up(x, m):
    return ((x + m - 1) // m) * m


def ghmc_loss(pred, target, *, block_rows=4096, num_splits=2):
    """pred: (N, C) logits (any float dtype), target: (N,) int labels in [0, C) or -100."""
    N, C = pred.shape

    # Lane-dense layout: rows map to lanes, so the row tile T is a multiple of 128.
    # A (C=11->16, T) f32 tile is only T/16 KiB, so even T=4096 double-buffered is well
    # under the default scoped VMEM on v5e/v6e/v7x.
    T = max(LANES, min(_round_up(block_rows, LANES), _round_up(N, LANES)))
    n_tiles = (N + T - 1) // T
    P = max(1, min(num_splits, n_tiles))       # leading "parallel" axis (megacore / v7x)
    S = (n_tiles + P - 1) // P
    n_pad = P * S * T

    pred_t = jnp.transpose(pred)                              # (C, N): one cheap XLA transpose
    tgt = target.astype(jnp.int32).reshape(1, N)
    if n_pad != N:
        pred_t = jnp.pad(pred_t, ((0, 0), (0, n_pad - N)))
        tgt = jnp.pad(tgt, ((0, 0), (0, n_pad - N)), constant_values=IGNORE_INDEX)

    kernel = functools.partial(ghmc_kernel, n_rows_total=N)
    counts, sums = pl.pallas_call(
        kernel,
        out_shape=(
            jax.ShapeDtypeStruct((P * BINS_PAD, LANES), jnp.float32),
            jax.ShapeDtypeStruct((P * BINS_PAD, LANES), jnp.float32),
        ),
        grid=(P, S),
        in_specs=[
            pl.BlockSpec((C, T), lambda p, s: (0, p * S + s)),   # logits tile, native dtype
            pl.BlockSpec((1, T), lambda p, s: (0, p * S + s)),   # labels tile
        ],
        out_specs=(
            pl.BlockSpec((BINS_PAD, LANES), lambda p, s: (p, 0)),  # per-split partial counts
            pl.BlockSpec((BINS_PAD, LANES), lambda p, s: (p, 0)),  # per-split partial sums
        ),
        compiler_params=pltpu.CompilerParams(
            dimension_semantics=("parallel", "arbitrary")),
    )(pred_t, tgt)

    # Tiny O(bins) epilogue in plain XLA: fold per-split / per-lane partials, form the scalar.
    counts = counts.reshape(P, BINS_PAD, LANES).sum(axis=(0, 2))   # (16,)
    sums = sums.reshape(P, BINS_PAD, LANES).sum(axis=(0, 2))       # (16,)
    c_b = counts[:BINS]
    s_b = sums[:BINS]
    valid_cnt = counts[VALID_ROW]
    nonempty = c_b > 0.0
    n_bins = jnp.sum(nonempty.astype(jnp.float32))
    total = jnp.sum(jnp.where(nonempty, s_b / jnp.maximum(c_b, 1.0), 0.0))
    scale = jnp.float32(N) / (10.0 * jnp.maximum(n_bins, 1.0) * jnp.maximum(valid_cnt, 1.0))
    return jnp.where(n_bins > 0.0, -scale * total, jnp.float32(0.0))


def ghmc_reference(pred, target):
    """Pure-JAX mirror of the PyTorch module (self-check)."""
    pred = pred.astype(jnp.float32)
    N, _ = pred.shape
    p = jax.nn.softmax(pred, axis=1)
    p_true = jnp.take_along_axis(p, target.reshape(-1, 1).astype(jnp.int32), axis=1)[:, 0]
    g = jnp.abs(p_true - 1.0)
    row_w = jnp.zeros_like(g)
    n = jnp.float32(0.0)
    for i in range(BINS):
        lo = jnp.float32(i) / BINS
        hi = jnp.float32(i + 1) / BINS
        inds = (g >= lo) & (g < hi)
        num = jnp.sum(inds.astype(jnp.float32))
        row_w = row_w + jnp.where(inds & (num > 0), N / (10.0 * jnp.maximum(num, 1.0)), 0.0)
        n = n + (num > 0).astype(jnp.float32)
    row_w = jnp.where(n > 0, row_w / n, row_w)
    valid = (target != IGNORE_INDEX).astype(jnp.float32)
    return -jnp.sum(valid * row_w * jnp.log(p_true)) / jnp.maximum(jnp.sum(valid), 1.0)


if __name__ == "__main__":
    key = jax.random.PRNGKey(0)
    k_pred, k_tgt, k_pred2, k_tgt2 = jax.random.split(key, 4)

    # Small shape consistent with the module: 11 classes (F.one_hot(target, 11)).
    N, C = 8, 11
    pred = jax.random.normal(k_pred, (N, C), dtype=jnp.float32)
    # F.one_hot requires non-negative labels, so targets lie in [0, 11). ignore_index rows
    # would crash the PyTorch reference; the kernel masks them safely if ever present.
    target = jax.random.randint(k_tgt, (N,), 0, C, dtype=jnp.int32)

    loss = ghmc_loss(pred, target)
    jax.block_until_ready(loss)
    ref = ghmc_reference(pred, target)
    assert bool(jnp.isfinite(loss)), f"non-finite loss: {loss}"
    assert bool(jnp.allclose(loss, ref, rtol=1e-3, atol=1e-5)), (float(loss), float(ref))

    # Exercise the multi-tile / parallel-split path (small block_rows forces several steps).
    N2 = 300
    pred2 = jax.random.normal(k_pred2, (N2, C), dtype=jnp.float32)
    target2 = jax.random.randint(k_tgt2, (N2,), 0, C, dtype=jnp.int32)
    loss2 = ghmc_loss(pred2, target2, block_rows=128, num_splits=2)
    jax.block_until_ready(loss2)
    ref2 = ghmc_reference(pred2, target2)
    assert bool(jnp.allclose(loss2, ref2, rtol=1e-3, atol=1e-5)), (float(loss2), float(ref2))

    print("KERNEL_OK")
</pallas_src>

<mosaic_0001>
module attributes {stable_mosaic.version = 11 : i64} {
  func.func @ghmc_kernel(%arg0: i32, %arg1: i32, %arg2: memref<11x128xf32, #tpu.memory_space<vmem>>, %arg3: memref<1x128xi32, #tpu.memory_space<vmem>>, %arg4: memref<16x128xf32, #tpu.memory_space<vmem>>, %arg5: memref<16x128xf32, #tpu.memory_space<vmem>>) attributes {dimension_semantics = [#tpu.dimension_semantics<parallel>, #tpu.dimension_semantics<arbitrary>], iteration_bounds = array<i64: 1, 1>, scalar_prefetch = 0 : i64, scratch_operands = 0 : i64, tpu.core_type = #tpu.core_type<tc>, window_params = [{transform_indices = @transform_0, window_bounds = array<i64: 11, 128>}, {transform_indices = @transform_1, window_bounds = array<i64: 1, 128>}, {transform_indices = @transform_2, window_bounds = array<i64: 16, 128>}, {transform_indices = @transform_3, window_bounds = array<i64: 16, 128>}]} {
    %c0_i32 = arith.constant 0 : i32
    %0 = arith.cmpi eq, %arg1, %c0_i32 : i32
    %1 = arith.extui %0 : i1 to i32
    %c0_i32_0 = arith.constant 0 : i32
    %2 = arith.cmpi ne, %1, %c0_i32_0 : i32
    scf.if %2 {
      %cst_19 = arith.constant 0.000000e+00 : f32
      %68 = vector.broadcast %cst_19 : f32 to vector<16x128xf32>
      %c0_20 = arith.constant 0 : index
      %c0_21 = arith.constant 0 : index
      %69 = vector.load %arg4[%c0_20, %c0_21] : memref<16x128xf32, #tpu.memory_space<vmem>>, vector<16x128xf32>
      tpu.vector_store %arg4[%c0_20, %c0_21], %68 {strides = array<i32>} : memref<16x128xf32, #tpu.memory_space<vmem>>, vector<16x128xf32>,
      %cst_22 = arith.constant 0.000000e+00 : f32
      %70 = vector.broadcast %cst_22 : f32 to vector<16x128xf32>
      %c0_23 = arith.constant 0 : index
      %c0_24 = arith.constant 0 : index
      %71 = vector.load %arg5[%c0_23, %c0_24] : memref<16x128xf32, #tpu.memory_space<vmem>>, vector<16x128xf32>
      tpu.vector_store %arg5[%c0_23, %c0_24], %70 {strides = array<i32>} : memref<16x128xf32, #tpu.memory_space<vmem>>, vector<16x128xf32>,
    } else {
    }
    %c0 = arith.constant 0 : index
    %c0_1 = arith.constant 0 : index
    %3 = vector.load %arg2[%c0, %c0_1] : memref<11x128xf32, #tpu.memory_space<vmem>>, vector<11x128xf32>
    %c0_2 = arith.constant 0 : index
    %c0_3 = arith.constant 0 : index
    %4 = vector.load %arg3[%c0_2, %c0_3] : memref<1x128xi32, #tpu.memory_space<vmem>>, vector<1x128xi32>
    %c1_i32 = arith.constant 1 : i32
    %5 = arith.muli %arg0, %c1_i32 : i32
    %6 = arith.addi %5, %arg1 : i32
    %c128_i32 = arith.constant 128 : i32
    %7 = arith.muli %6, %c128_i32 : i32
    %8 = tpu.iota {dimensions = array<i32: 1>} : vector<1x128xi32>
    %9 = vector.broadcast %7 : i32 to vector<1x128xi32>
    %10 = arith.addi %8, %9 : vector<1x128xi32>
    %c8_i32 = arith.constant 8 : i32
    %11 = vector.broadcast %c8_i32 : i32 to vector<1x128xi32>
    %12 = arith.cmpi slt, %10, %11 : vector<1x128xi32>
    %c-100_i32 = arith.constant -100 : i32
    %13 = vector.broadcast %c-100_i32 : i32 to vector<1x128xi32>
    %14 = arith.cmpi ne, %4, %13 : vector<1x128xi32>
    %15 = arith.andi %12, %14 : vector<1x128xi1>
    %16 = tpu.iota {dimensions = array<i32: 0>} : vector<11x128xi32>
    %17 = vector.broadcast %4 : vector<1x128xi32> to vector<11x128xi32>
    %18 = arith.cmpi eq, %16, %17 : vector<11x128xi32>
    %19 = arith.extui %18 : vector<11x128xi1> to vector<11x128xi32>
    %20 = arith.sitofp %19 : vector<11x128xi32> to vector<11x128xf32>
    %21 = arith.mulf %3, %20 : vector<11x128xf32>
    %cst = arith.constant dense<0.000000e+00> : vector<128xf32>
    %22 = vector.multi_reduction <add>, %21, %cst [0] : vector<11x128xf32> to vector<128xf32>
    %23 = vector.shape_cast %22 : vector<128xf32> to vector<1x128xf32>
    %cst_4 = arith.constant dense<0xFF800000> : vector<128xf32>
    %24 = vector.multi_reduction <maximumf>, %3, %cst_4 [0] : vector<11x128xf32> to vector<128xf32>
    %25 = vector.shape_cast %24 : vector<128xf32> to vector<1x128xf32>
    %26 = vector.broadcast %25 : vector<1x128xf32> to vector<11x128xf32>
    %27 = arith.subf %3, %26 : vector<11x128xf32>
    %28 = math.exp %27 : vector<11x128xf32>
    %cst_5 = arith.constant dense<0.000000e+00> : vector<128xf32>
    %29 = vector.multi_reduction <add>, %28, %cst_5 [0] : vector<11x128xf32> to vector<128xf32>
    %30 = vector.shape_cast %29 : vector<128xf32> to vector<1x128xf32>
    %31 = math.log %30 : vector<1x128xf32>
    %32 = arith.addf %25, %31 : vector<1x128xf32>
    %33 = arith.subf %23, %32 : vector<1x128xf32>
    %34 = math.exp %33 : vector<1x128xf32>
    %cst_6 = arith.constant 1.000000e+00 : f32
    %35 = vector.broadcast %cst_6 : f32 to vector<1x128xf32>
    %36 = arith.subf %34, %35 : vector<1x128xf32>
    %37 = math.absf %36 : vector<1x128xf32>
    %cst_7 = arith.constant 1.000000e+01 : f32
    %38 = vector.broadcast %cst_7 : f32 to vector<1x128xf32>
    %39 = arith.mulf %37, %38 : vector<1x128xf32>
    %40 = math.floor %39 : vector<1x128xf32>
    %41 = arith.fptosi %40 : vector<1x128xf32> to vector<1x128xi32>
    %42 = tpu.iota {dimensions = array<i32: 0>} : vector<16x128xi32>
    %43 = vector.broadcast %41 : vector<1x128xi32> to vector<16x128xi32>
    %44 = arith.cmpi eq, %42, %43 : vector<16x128xi32>
    %c15_i32 = arith.constant 15 : i32
    %45 = vector.broadcast %c15_i32 : i32 to vector<16x128xi32>
    %46 = arith.cmpi eq, %42, %45 : vector<16x128xi32>
    %47 = vector.broadcast %15 : vector<1x128xi1> to vector<16x128xi1>
    %48 = arith.andi %46, %47 : vector<16x128xi1>
    %49 = arith.ori %44, %48 : vector<16x128xi1>
    %50 = vector.broadcast %12 : vector<1x128xi1> to vector<16x128xi1>
    %51 = arith.andi %49, %50 : vector<16x128xi1>
    %52 = arith.extui %51 : vector<16x128xi1> to vector<16x128xi32>
    %53 = arith.sitofp %52 : vector<16x128xi32> to vector<16x128xf32>
    %cst_8 = arith.constant 0.000000e+00 : f32
    %54 = vector.broadcast %cst_8 : f32 to vector<1x128xf32>
    %55 = arith.select %15, %33, %54 : vector<1x128xi1>, vector<1x128xf32>
    %56 = vector.broadcast %55 : vector<1x128xf32> to vector<16x128xf32>
    %57 = arith.mulf %53, %56 : vector<16x128xf32>
    %cst_9 = arith.constant 0.000000e+00 : f32
    %58 = vector.broadcast %cst_9 : f32 to vector<16x128xf32>
    %cst_10 = arith.constant 0.000000e+00 : f32
    %59 = vector.broadcast %cst_10 : f32 to vector<16x128xf32>
    %60 = arith.addf %58, %53 : vector<16x128xf32>
    %61 = arith.addf %59, %57 : vector<16x128xf32>
    %c0_11 = arith.constant 0 : index
    %c0_12 = arith.constant 0 : index
    %62 = vector.load %arg4[%c0_11, %c0_12] : memref<16x128xf32, #tpu.memory_space<vmem>>, vector<16x128xf32>
    %63 = arith.addf %62, %60 : vector<16x128xf32>
    %c0_13 = arith.constant 0 : index
    %c0_14 = arith.constant 0 : index
    %64 = vector.load %arg4[%c0_13, %c0_14] : memref<16x128xf32, #tpu.memory_space<vmem>>, vector<16x128xf32>
    tpu.vector_store %arg4[%c0_13, %c0_14], %63 {strides = array<i32>} : memref<16x128xf32, #tpu.memory_space<vmem>>, vector<16x128xf32>,
    %c0_15 = arith.constant 0 : index
    %c0_16 = arith.constant 0 : index
    %65 = vector.load %arg5[%c0_15, %c0_16] : memref<16x128xf32, #tpu.memory_space<vmem>>, vector<16x128xf32>
    %66 = arith.addf %65, %61 : vector<16x128xf32>
    %c0_17 = arith.constant 0 : index
    %c0_18 = arith.constant 0 : index
    %67 = vector.load %arg5[%c0_17, %c0_18] : memref<16x128xf32, #tpu.memory_space<vmem>>, vector<16x128xf32>
    tpu.vector_store %arg5[%c0_17, %c0_18], %66 {strides = array<i32>} : memref<16x128xf32, #tpu.memory_space<vmem>>, vector<16x128xf32>,
    return
  }
  func.func @transform_0(%arg0: i32, %arg1: i32) -> (i32, i32) {
    %c1_i32 = arith.constant 1 : i32
    %0 = arith.muli %arg0, %c1_i32 : i32
    %1 = arith.addi %0, %arg1 : i32
    %c0_i32 = arith.constant 0 : i32
    %c0_i32_0 = arith.constant 0 : i32
    return %c0_i32, %1 : i32, i32
  }
  func.func @transform_1(%arg0: i32, %arg1: i32) -> (i32, i32) {
    %c1_i32 = arith.constant 1 : i32
    %0 = arith.muli %arg0, %c1_i32 : i32
    %1 = arith.addi %0, %arg1 : i32
    %c0_i32 = arith.constant 0 : i32
    %c0_i32_0 = arith.constant 0 : i32
    return %c0_i32, %1 : i32, i32
  }
  func.func @transform_2(%arg0: i32, %arg1: i32) -> (i32, i32) {
    %c0_i32 = arith.constant 0 : i32
    %c0_i32_0 = arith.constant 0 : i32
    return %arg0, %c0_i32 : i32, i32
  }
  func.func @transform_3(%arg0: i32, %arg1: i32) -> (i32, i32) {
    %c0_i32 = arith.constant 0 : i32
    %c0_i32_0 = arith.constant 0 : i32
    return %arg0, %c0_i32 : i32, i32
  }
}

</mosaic_0001>

<llo_original>
// kernel: tpu_custom_call.1
$region0: #{tpu_custom_call.1}
  #allocation0 [shape = 'u32[]', space=smem, size = 0x4, offset = 0x4, fixed_abs, tag = 'smem constant byte address 0x4 - core index']
  #allocation1 [shape = 'u32[144,128]{1,0:T(1,128)}', space=vmem, size = 0x12000, scoped, tag = 'internal scratch']
  %s0 = inlined_call_operand.hbm [shape: f32[11,128], index: 0, kind: input, shape index: {}]
  %s1 = inlined_call_operand.vmem [shape: s32[1,128], index: 1, kind: input, shape index: {}]
  %s2 = inlined_call_operand.hbm [shape: f32[16,128], index: 2, kind: output, shape index: {0}]
  %s3 = inlined_call_operand.hbm [shape: f32[16,128], index: 3, kind: output, shape index: {1}]
  %4 = xla_tuple %s2, %s3
  %s5 = sld [smem:[#allocation0]]
  $region34: #{tpu_custom_call.1} parent=0
    _
  %s7 = ssub.s32 1, %s5
  %s8 = scalar_select 0, %s7, %s5
  $region1: #{tpu_custom_call.1} parent=0
    #allocation2 [shape = 'u8[8192]{0}', space=vmem, size = 0x2000, scoped, tag = 'input window, operand 0, single buffered']
    #allocation3 [shape = 's32[1]{0}', space=sflag, size = 0x4, scoped, tag = 'scoped memory for tpu_custom_call.1']
    #allocation4 [shape = 's32[1]{0}', space=sflag, size = 0x4, scoped, tag = 'scoped memory for tpu_custom_call.1']
    #allocation5 [shape = 'u8[8192]{0}', space=vmem, size = 0x2000, scoped, tag = 'output window, operand 0, single buffered']
    #allocation6 [shape = 'u8[8192]{0}', space=vmem, size = 0x2000, scoped, tag = 'output window, operand 1, single buffered']
    #allocation7 [shape = 's32[1]{0}', space=sflag, size = 0x4, scoped, tag = 'scoped memory for tpu_custom_call.1']
    %9 = vsyncpa [#allocation3], 0
    %10 = vsyncpa [#allocation4], 0
    %11 = vsyncpa [#allocation7], 0
    // Predicated region
    $region2: #{tpu_custom_call.1} parent=1 // pred_check
      _
    $region3: #{tpu_custom_call.1} parent=1 // pred_check_branch
      %13 = sbr.rel (0) target = $region5
    $region4: #{tpu_custom_call.1} parent=1 // pred_region
      %s14 = sadd.s32 0, 0
      %s16 = ssub.s32 256, 256
      %17 = vsyncadd [#allocation3], %s16
      %s18 = smul.addr %s14, 128
      %s19 = scalar_lea.hbm %s0, %s18
      %s20 = sshll.u32 [#allocation2], 4
      %s21 = int_to_ptr.vmem [resolvable:$true] %s20
      %26 = dma.hbm_to_vmem [thread:$0]  %s19, 256, %s21, [#allocation3], 128, 128, 8
    $region5: #{tpu_custom_call.1} parent=1 // pred_fallthru
      _
    // Predicated region
    $region6: #{tpu_custom_call.1} parent=1 // pred_check
      _
    $region7: #{tpu_custom_call.1} parent=1 // pred_check_branch
      %28 = sbr.rel (0) target = $region9
    $region8: #{tpu_custom_call.1} parent=1 // pred_region
      %s29 = sadd.s32 0, 0
      %p30 = scmp.lt.s32.totalorder %s29, 0
      %s31 = scalar_select %p30, %s29, 0
      %s32 = scalar_lea.vmem %s1, %s31
      %s33 = sadd.s32 0, 0
    $region9: #{tpu_custom_call.1} parent=1 // pred_fallthru
      _
    // Predicated region
    $region10: #{tpu_custom_call.1} parent=1 // pred_check
      _
    $region11: #{tpu_custom_call.1} parent=1 // pred_check_branch
      %35 = sbr.rel (0) target = $region13
    $region12: #{tpu_custom_call.1} parent=1 // pred_region
      %36 = dma.done [#allocation3], 256
    $region13: #{tpu_custom_call.1} parent=1 // pred_fallthru
      _
    %s37 = sadd.s32 0, 0
    %p38 = scmp.lt.s32.totalorder %s37, 0
    %s39 = scalar_select %p38, %s37, 0
    %s40 = scalar_lea.vmem %s1, %s39
    %s41 = sadd.s32 0, 0
    %s42 = sadd.s32 0, 0
    %p43 = scmp.lt.s32.totalorder %s42, 0
    %s44 = scalar_select %p43, %s42, 0
    %s45 = scalar_lea.vmem %s1, %s44
    %s46 = sadd.s32 0, 0
    %p47 = scmp.eq.s32.totalorder 0, 0
    // Predicated region
    $region14: #{tpu_custom_call.1} parent=1 // pred_check
      %p48 = pneg %p47
    $region15: #{tpu_custom_call.1} parent=1 // pred_check_branch
      %50 = sbr.rel (%p48) target = $region17
    $region16: #{tpu_custom_call.1} parent=1 // pred_region
      %51 = vst [vmem:[#allocation5] sm:$0xff] 0.0
      %52 = vst [vmem:[#allocation5 + $0x8] sm:$0xff] 0.0
      %53 = vst [vmem:[#allocation6] sm:$0xff] 0.0
      %54 = vst [vmem:[#allocation6 + $0x8] sm:$0xff] 0.0
    $region17: #{tpu_custom_call.1} parent=1 // pred_fallthru
      _
    %v55 = vld [vmem:[#allocation2] sm:$0xff]
    %v56 = vld [vmem:[#allocation2 + $0x8] sm:$0x7]
    %v57 = vld [vmem:[%s45] sm:$0x1]
    %s58 = sadd.s32 0, 0
    %s59 = smul.u32 %s58, 128
    %v60 = vlaneseq
    %v61 = vand.u32 %v60, 127
    %v62 = vstv %s59
    %v63 = vadd.s32 %v61, %v62
    %vm64 = vcmp.lt.s32.totalorder %v63, 8
    %vm65 = vcmp.ne.s32.totalorder %v57, 4294967196
    %vm66 = vmand %vm64, %vm65
    %v67 = vlaneseq
    %v68 = vshrl.u32 %v67, 7
    %v69 = vadd.s32 %v68, 8
    %v70 = vlaneseq
    %v71 = vshrl.u32 %v70, 7
    %v72 = vsub.s32 0, %v71
    %v73 = vrot.slane %v57, %v72
    %vm74 = vcmp.eq.s32.totalorder %v68, %v73
    %vm75 = vcmp.eq.s32.totalorder %v69, %v73
    %v76 = vsel %vm74, 1, 0
    %v77 = vsel %vm75, 1, 0
    %v78 = vcvt.s32.f32 %v76
    %v79 = vcvt.s32.f32 %v77
    %v80 = vmul.f32 %v55, %v78
    %v81 = vmul.f32 %v56, %v79
    %vm82 = vcmask 1042432
    %v83 = vsel %vm82, %v81, 0.0
    %v84 = vadd.f32 %v80, %v83
    %v85 = vrot.slane %v84, 4
    %v86 = vadd.f32 %v84, %v85
    %v87 = vrot.slane %v86, 2
    %v88 = vadd.f32 %v86, %v87
    %v89 = vrot.slane %v88, 1
    %v90 = vadd.f32 %v88, %v89
    %v91 = vsel %vm82, %v56, -inf
    %v92 = vmax.f32 %v55, %v91
    %v93 = vrot.slane %v92, 4
    %v94 = vmax.f32 %v92, %v93
    %v95 = vrot.slane %v94, 2
    %v96 = vmax.f32 %v94, %v95
    %v97 = vrot.slane %v96, 1
    %v98 = vmax.f32 %v96, %v97
    %v99 = vsub.f32 %v55, %v98
    %v100 = vsub.f32 %v56, %v98
    %v101 = vmul.f32 %v99, 1.442695
    %v102 = vpow.pop %v101
    %v103 = vmul.f32 %v100, 1.442695
    %v104 = vpow.pop %v103
    %v105 = vsel %vm82, %v104, 0.0
    %v106 = vadd.f32 %v102, %v105
    %v107 = vrot.slane %v106, 4
    %v108 = vadd.f32 %v106, %v107
    %v109 = vrot.slane %v108, 2
    %v110 = vadd.f32 %v108, %v109
    %v111 = vrot.slane %v110, 1
    %v112 = vadd.f32 %v110, %v111
    %v113 = vlog2.pop %v112
    %v114 = vmul.f32 %v113, 0.6931472
    %v115 = vadd.f32 %v98, %v114
    %v116 = vsub.f32 %v90, %v115
    %v117 = vmul.f32 %v116, 1.442695
    %v118 = vpow.pop %v117
    %v119 = vsub.f32 %v118, 1.0
    %v120 = vand.u32 2147483647, %v119
    %v121 = vmul.f32 %v120, 10.0
    %v122 = vfloor.f32 %v121
    %v123 = vcvt.f32.s32.to.zero.pseudo %v122
    %vm124 = vcmp.eq.s32.totalorder %v68, %v123
    %vm125 = vcmp.eq.s32.totalorder %v69, %v123
    %vm126 = vcmp.eq.s32.totalorder %v68, 15
    %vm127 = vcmp.eq.s32.totalorder %v69, 15
    %v128 = vsel %vm66, 1, 0
    %v129 = vlaneseq
    %v130 = vshrl.u32 %v129, 7
    %v131 = vsub.s32 0, %v130
    %v132 = vrot.slane %v128, %v131
    %vm133 = vcmp.eq.s32.totalorder %v132, 1
    %vm134 = vmand %vm126, %vm133
    %vm135 = vmand %vm127, %vm133
    %vm136 = vmor %vm124, %vm134
    %vm137 = vmor %vm125, %vm135
    %v138 = vsel %vm64, 1, 0
    %vm139 = vcmp.eq.s32.totalorder %v138, 1
    %vm140 = vmand %vm136, %vm139
    %vm141 = vmand %vm137, %vm139
    %v142 = vsel %vm140, 1, 0
    %v143 = vsel %vm141, 1, 0
    %v144 = vcvt.s32.f32 %v142
    %v145 = vcvt.s32.f32 %v143
    %v146 = vsel %vm66, %v116, 0.0
    %v147 = vlaneseq
    %v148 = vshrl.u32 %v147, 7
    %v149 = vsub.s32 0, %v148
    %v150 = vrot.slane %v146, %v149
    %v151 = vmul.f32 %v144, %v150
    %v152 = vmul.f32 %v145, %v150
    %v153 = vadd.f32 %v144, 0.0
    %v154 = vadd.f32 %v145, 0.0
    %v155 = vadd.f32 %v151, 0.0
    %v156 = vadd.f32 %v152, 0.0
    %v157 = vld [vmem:[#allocation5] sm:$0xff]
    %v158 = vld [vmem:[#allocation5 + $0x8] sm:$0xff]
    %v159 = vadd.f32 %v157, %v153
    %v160 = vadd.f32 %v158, %v154
    %161 = vst [vmem:[#allocation5] sm:$0xff] %v159
    %162 = vst [vmem:[#allocation5 + $0x8] sm:$0xff] %v160
    %v163 = vld [vmem:[#allocation6] sm:$0xff]
    %v164 = vld [vmem:[#allocation6 + $0x8] sm:$0xff]
    %v165 = vadd.f32 %v163, %v155
    %v166 = vadd.f32 %v164, %v156
    %167 = vst [vmem:[#allocation6] sm:$0xff] %v165
    %168 = vst [vmem:[#allocation6 + $0x8] sm:$0xff] %v166
    // Predicated region
    $region18: #{tpu_custom_call.1} parent=1 // pred_check
      _
    $region19: #{tpu_custom_call.1} parent=1 // pred_check_branch
      %170 = sbr.rel (0) target = $region21
    $region20: #{tpu_custom_call.1} parent=1 // pred_region
      %s172 = ssub.s32 256, 256
      %173 = vsyncadd [#allocation4], %s172
      %s174 = sshll.u32 [#allocation5], 4
      %s175 = int_to_ptr.vmem [resolvable:$true] %s174
      %180 = dma.vmem_to_hbm [thread:$0]  %s175, 256, %s2, [#allocation4], 128, 128, 8
    $region21: #{tpu_custom_call.1} parent=1 // pred_fallthru
      _
    // Predicated region
    $region22: #{tpu_custom_call.1} parent=1 // pred_check
      _
    $region23: #{tpu_custom_call.1} parent=1 // pred_check_branch
      %182 = sbr.rel (0) target = $region25
    $region24: #{tpu_custom_call.1} parent=1 // pred_region
      %s184 = ssub.s32 256, 256
      %185 = vsyncadd [#allocation7], %s184
      %s186 = sshll.u32 [#allocation6], 4
      %s187 = int_to_ptr.vmem [resolvable:$true] %s186
      %192 = dma.vmem_to_hbm [thread:$0]  %s187, 256, %s3, [#allocation7], 128, 128, 8
    $region25: #{tpu_custom_call.1} parent=1 // pred_fallthru
      _
    // Predicated region
    $region26: #{tpu_custom_call.1} parent=1 // pred_check
      _
    $region27: #{tpu_custom_call.1} parent=1 // pred_check_branch
      %194 = sbr.rel (0) target = $region29
    $region28: #{tpu_custom_call.1} parent=1 // pred_region
      %195 = dma.done [#allocation4], 256
    $region29: #{tpu_custom_call.1} parent=1 // pred_fallthru
      _
    // Predicated region
    $region30: #{tpu_custom_call.1} parent=1 // pred_check
      _
    $region31: #{tpu_custom_call.1} parent=1 // pred_check_branch
      %197 = sbr.rel (0) target = $region33
    $region32: #{tpu_custom_call.1} parent=1 // pred_region
      %198 = dma.done [#allocation7], 256
    $region33: #{tpu_custom_call.1} parent=1 // pred_fallthru
      _
    %199 = vsyncpa [#allocation3], 1
    %200 = vsyncpa [#allocation4], 1
    %201 = vsyncpa [#allocation7], 1

</llo_original>
